<compile_context>
chip_gen: v6e
topology: v6e:2x2x1
jax: 0.10.0
libtpu: 0.0.40
codegen_flags: <defaults>
</compile_context>

<pallas_src>
import functools

import jax
import jax.numpy as jnp
from jax.experimental import pallas as pl
from jax.experimental.pallas import tpu as pltpu

GAMMA = 2.5  # module default


def _focal_loss_kernel(logits_ref, target_ref, out_ref, *, total_n, tile_n, gamma):
    i = pl.program_id(0)

    x = logits_ref[...]                                    # (TILE_N, C), input dtype
    t = target_ref[...]                                    # (TILE_N, 1) int32

    # Row max in the input dtype (no eager f32 upcast of the whole tile).
    m = jnp.max(x, axis=-1, keepdims=True)                 # (TILE_N, 1)

    # Pick x[n, target[n]] with a one-hot select on the *raw* logits: compare/select
    # runs on packed vregs for bf16 inputs; the sum is exact since only one element
    # per row is kept.
    cls = jax.lax.broadcasted_iota(jnp.int32, x.shape, 1)
    picked = jnp.sum(jnp.where(cls == t, x, 0), axis=-1, keepdims=True)   # (TILE_N, 1)

    # Numerically stable softmax pieces in f32 (only this path is upcast).
    shifted = (x - m).astype(jnp.float32)                  # (TILE_N, C), <= 0
    sumexp = jnp.sum(jnp.exp(shifted), axis=-1, keepdims=True)            # (TILE_N, 1)

    # ce = logsumexp(x) - x[target] = log(sumexp) - (x[target] - m)
    ce = jnp.log(sumexp) - (picked.astype(jnp.float32) - m.astype(jnp.float32))
    pt = jnp.exp(-ce)
    omp = jnp.maximum(1.0 - pt, 0.0)
    if gamma == 2.5:
        pow_term = omp * omp * jnp.sqrt(omp)               # (1-pt)**2.5 without exp/log
    else:
        pow_term = jnp.where(
            omp > 0.0,
            jnp.exp(gamma * jnp.log(jnp.maximum(omp, 1e-38))),
            0.0,
        )

    # Mask rows of a partially-filled last tile so padded rows don't contribute.
    row = jax.lax.broadcasted_iota(jnp.int32, (tile_n, 1), 0) + i * tile_n
    focal = jnp.where(row < total_n, pow_term * ce, 0.0)

    # One (8,128)-aligned partial-sum slab per grid step (unmasked store).
    out_ref[...] = jnp.full((8, 128), jnp.sum(focal), dtype=jnp.float32)


def _cdiv(a, b):
    return -(-a // b)


def _round_down8(v):
    return max(8, (int(v) // 8) * 8)


def _round_up8(v):
    return max(8, ((int(v) + 7) // 8) * 8)


def _vmem_capacity_bytes():
    try:
        return int(pltpu.get_tpu_info().vmem_capacity_bytes)
    except Exception:
        return 64 << 20            # conservative fallback: v7x per-TensorCore VMEM


def _per_row_vmem_bytes(c, itemsize):
    # double-buffered logits row + double-buffered 128-lane-padded target row
    # + ~4 full-row f32/i32 temporaries (shifted, exp(shifted), iota, select).
    return 2 * c * itemsize + 2 * 128 * 4 + 4 * c * 4


def _choose_tile_n(n, c, itemsize, vmem_cap, vmem_ceiling):
    per_buffer_budget = max(1 << 20, vmem_cap // 16)   # ~4 MiB (v7x) / ~8 MiB (v5e/v6e)
    working = max(4 << 20, int(vmem_ceiling / 1.3) - (2 << 20))

    rows_by_buffer = per_buffer_budget // max(1, c * itemsize)
    rows_by_total = working // _per_row_vmem_bytes(c, itemsize)
    budget_rows = _round_down8(min(rows_by_buffer, rows_by_total))

    if n <= budget_rows:
        if n >= 16:
            # Split into two balanced tiles so the "parallel" grid axis keeps both
            # v7x TensorCores busy instead of serializing one block.
            return _round_up8(_cdiv(n, 2))
        return n                                      # full-dim single block (legal)

    tile_n = budget_rows
    num_tiles = _cdiv(n, tile_n)
    if num_tiles > 1 and num_tiles % 2 == 1:
        # Rebalance to an even tile count for the 2-TC megacore case.
        tile_n = _round_up8(_cdiv(n, num_tiles + 1))
    return tile_n


def focal_loss_with_logits(logits, target, gamma=GAMMA):
    """logits: (N, C) float, target: (N,) int class indices -> scalar float32 loss."""
    n, c = logits.shape
    itemsize = jnp.dtype(logits.dtype).itemsize

    vmem_cap = _vmem_capacity_bytes()
    vmem_ceiling = max(32 << 20, int(0.75 * vmem_cap))   # headroom for compiler scratch
    tile_n = _choose_tile_n(n, c, itemsize, vmem_cap, vmem_ceiling)
    num_tiles = _cdiv(n, tile_n)

    estimate = (tile_n * _per_row_vmem_bytes(c, itemsize)   # inputs + full-tile temps
                + 2 * 8 * 128 * 4                           # output slab double buffer
                + (1 << 20))                                 # slack
    vmem_limit = int(min(vmem_ceiling, max(int(1.25 * estimate), 32 << 20)))

    t2d = target.astype(jnp.int32).reshape(n, 1)

    kernel = functools.partial(
        _focal_loss_kernel, total_n=n, tile_n=tile_n, gamma=gamma
    )

    partials = pl.pallas_call(
        kernel,
        out_shape=jax.ShapeDtypeStruct((8 * num_tiles, 128), jnp.float32),
        grid_spec=pltpu.PrefetchScalarGridSpec(
            num_scalar_prefetch=0,
            grid=(num_tiles,),
            in_specs=[
                pl.BlockSpec((tile_n, c), lambda i: (i, 0)),   # logits tile
                pl.BlockSpec((tile_n, 1), lambda i: (i, 0)),   # target tile
            ],
            out_specs=pl.BlockSpec((8, 128), lambda i: (i, 0)),
        ),
        compiler_params=pltpu.CompilerParams(
            dimension_semantics=("parallel",),
            vmem_limit_bytes=vmem_limit,
        ),
    )(logits, t2d)

    # Tiny final reduction in plain JAX (keeps the grid axis parallel / 2-TC friendly).
    return jnp.sum(partials[::8, 0]) / jnp.float32(n)


def _reference(logits, target, gamma=GAMMA):
    log_probs = jax.nn.log_softmax(logits.astype(jnp.float32), axis=-1)
    ce = -jnp.take_along_axis(log_probs, target[:, None].astype(jnp.int32), axis=-1)[:, 0]
    pt = jnp.exp(-ce)
    return jnp.mean((1.0 - pt) ** gamma * ce)


if __name__ == "__main__":
    key = jax.random.PRNGKey(0)
    k1, k2, k3, k4, k5, k6 = jax.random.split(key, 6)

    # small primary test (single full-dim tile)
    N, C = 8, 32
    logits = jax.random.normal(k1, (N, C), dtype=jnp.float32)
    target = jax.random.randint(k2, (N,), 0, C, dtype=jnp.int32)
    loss = jax.block_until_ready(focal_loss_with_logits(logits, target))
    ref = _reference(logits, target)
    assert jnp.allclose(loss, ref, atol=1e-5, rtol=1e-5), (loss, ref)

    # multi-tile test (exercises the 2-tile split, pipelining and partial-tile masking)
    N2, C2 = 1100, 160
    logits2 = jax.random.normal(k3, (N2, C2), dtype=jnp.float32)
    target2 = jax.random.randint(k4, (N2,), 0, C2, dtype=jnp.int32)
    loss2 = jax.block_until_ready(focal_loss_with_logits(logits2, target2))
    ref2 = _reference(logits2, target2)
    assert jnp.allclose(loss2, ref2, atol=1e-5, rtol=1e-5), (loss2, ref2)

    # odd shapes: narrow C and a heavily padded last tile
    N3, C3 = 37, 7
    logits3 = jax.random.normal(k5, (N3, C3), dtype=jnp.float32)
    target3 = jax.random.randint(k6, (N3,), 0, C3, dtype=jnp.int32)
    loss3 = jax.block_until_ready(focal_loss_with_logits(logits3, target3))
    ref3 = _reference(logits3, target3)
    assert jnp.allclose(loss3, ref3, atol=1e-5, rtol=1e-5), (loss3, ref3)

    print("KERNEL_OK")
</pallas_src>

<mosaic_0001>
module attributes {stable_mosaic.version = 11 : i64} {
  func.func @_focal_loss_kernel(%arg0: i32, %arg1: memref<8x32xf32, #tpu.memory_space<vmem>>, %arg2: memref<8x1xi32, #tpu.memory_space<vmem>>, %arg3: memref<8x128xf32, #tpu.memory_space<vmem>>) attributes {dimension_semantics = [#tpu.dimension_semantics<parallel>], iteration_bounds = array<i64: 1>, scalar_prefetch = 0 : i64, scratch_operands = 0 : i64, tpu.core_type = #tpu.core_type<tc>, window_params = [{transform_indices = @transform_0, window_bounds = array<i64: 8, 32>}, {transform_indices = @transform_1, window_bounds = array<i64: 8, 1>}, {transform_indices = @transform_2, window_bounds = array<i64: 8, 128>}]} {
    %c0 = arith.constant 0 : index
    %c0_0 = arith.constant 0 : index
    %0 = vector.load %arg1[%c0, %c0_0] : memref<8x32xf32, #tpu.memory_space<vmem>>, vector<8x32xf32>
    %c0_1 = arith.constant 0 : index
    %c0_2 = arith.constant 0 : index
    %1 = vector.load %arg2[%c0_1, %c0_2] : memref<8x1xi32, #tpu.memory_space<vmem>>, vector<8x1xi32>
    %cst = arith.constant dense<0xFF800000> : vector<8xf32>
    %2 = vector.multi_reduction <maximumf>, %0, %cst [1] : vector<8x32xf32> to vector<8xf32>
    %3 = vector.shape_cast %2 : vector<8xf32> to vector<8x1xf32>
    %4 = tpu.iota {dimensions = array<i32: 1>} : vector<8x32xi32>
    %5 = vector.broadcast %1 : vector<8x1xi32> to vector<8x32xi32>
    %6 = arith.cmpi eq, %4, %5 : vector<8x32xi32>
    %c0_i32 = arith.constant 0 : i32
    %7 = arith.sitofp %c0_i32 : i32 to f32
    %8 = vector.broadcast %7 : f32 to vector<8x32xf32>
    %9 = arith.select %6, %0, %8 : vector<8x32xi1>, vector<8x32xf32>
    %cst_3 = arith.constant dense<0.000000e+00> : vector<8xf32>
    %10 = vector.multi_reduction <add>, %9, %cst_3 [1] : vector<8x32xf32> to vector<8xf32>
    %11 = vector.shape_cast %10 : vector<8xf32> to vector<8x1xf32>
    %12 = vector.broadcast %3 : vector<8x1xf32> to vector<8x32xf32>
    %13 = arith.subf %0, %12 : vector<8x32xf32>
    %14 = math.exp %13 : vector<8x32xf32>
    %cst_4 = arith.constant dense<0.000000e+00> : vector<8xf32>
    %15 = vector.multi_reduction <add>, %14, %cst_4 [1] : vector<8x32xf32> to vector<8xf32>
    %16 = vector.shape_cast %15 : vector<8xf32> to vector<8x1xf32>
    %17 = math.log %16 : vector<8x1xf32>
    %18 = arith.subf %11, %3 : vector<8x1xf32>
    %19 = arith.subf %17, %18 : vector<8x1xf32>
    %cst_5 = arith.constant 0.000000e+00 : f32
    %20 = vector.broadcast %cst_5 : f32 to vector<8x1xf32>
    %21 = arith.subf %20, %19 : vector<8x1xf32>
    %22 = math.exp %21 : vector<8x1xf32>
    %cst_6 = arith.constant 1.000000e+00 : f32
    %23 = vector.broadcast %cst_6 : f32 to vector<8x1xf32>
    %24 = arith.subf %23, %22 : vector<8x1xf32>
    %cst_7 = arith.constant 0.000000e+00 : f32
    %25 = vector.broadcast %cst_7 : f32 to vector<8x1xf32>
    %26 = arith.maximumf %24, %25 : vector<8x1xf32>
    %27 = arith.mulf %26, %26 : vector<8x1xf32>
    %28 = math.sqrt %26 : vector<8x1xf32>
    %29 = arith.mulf %27, %28 : vector<8x1xf32>
    %30 = tpu.iota {dimensions = array<i32: 0>} : vector<8x1xi32>
    %c8_i32 = arith.constant 8 : i32
    %31 = arith.muli %arg0, %c8_i32 : i32
    %32 = vector.broadcast %31 : i32 to vector<8x1xi32>
    %33 = arith.addi %30, %32 : vector<8x1xi32>
    %c8_i32_8 = arith.constant 8 : i32
    %34 = vector.broadcast %c8_i32_8 : i32 to vector<8x1xi32>
    %35 = arith.cmpi slt, %33, %34 : vector<8x1xi32>
    %36 = arith.mulf %29, %19 : vector<8x1xf32>
    %cst_9 = arith.constant 0.000000e+00 : f32
    %37 = vector.broadcast %cst_9 : f32 to vector<8x1xf32>
    %38 = arith.select %35, %36, %37 : vector<8x1xi1>, vector<8x1xf32>
    %39 = vector.shape_cast %38 : vector<8x1xf32> to vector<1x8x1xf32>
    %cst_10 = arith.constant dense<0.000000e+00> : vector<1xf32>
    %40 = vector.multi_reduction <add>, %39, %cst_10 [1, 2] : vector<1x8x1xf32> to vector<1xf32>
    %41 = vector.shape_cast %40 : vector<1xf32> to vector<1x1x1xf32>
    %42 = vector.extract %41[0, 0, 0] : f32 from vector<1x1x1xf32>
    %43 = vector.broadcast %42 : f32 to vector<8x128xf32>
    %c0_11 = arith.constant 0 : index
    %c0_12 = arith.constant 0 : index
    %44 = vector.load %arg3[%c0_11, %c0_12] : memref<8x128xf32, #tpu.memory_space<vmem>>, vector<8x128xf32>
    tpu.vector_store %arg3[%c0_11, %c0_12], %43 {strides = array<i32>} : memref<8x128xf32, #tpu.memory_space<vmem>>, vector<8x128xf32>,
    return
  }
  func.func @transform_0(%arg0: i32) -> (i32, i32) {
    %c0_i32 = arith.constant 0 : i32
    %c0_i32_0 = arith.constant 0 : i32
    return %arg0, %c0_i32 : i32, i32
  }
  func.func @transform_1(%arg0: i32) -> (i32, i32) {
    %c0_i32 = arith.constant 0 : i32
    %c0_i32_0 = arith.constant 0 : i32
    return %arg0, %c0_i32 : i32, i32
  }
  func.func @transform_2(%arg0: i32) -> (i32, i32) {
    %c0_i32 = arith.constant 0 : i32
    %c0_i32_0 = arith.constant 0 : i32
    return %arg0, %c0_i32 : i32, i32
  }
}

</mosaic_0001>

<llo_original>
// kernel: tpu_custom_call.1
$region0: #{tpu_custom_call.1}
  #allocation0 [shape = 'u32[]', space=smem, size = 0x4, offset = 0x4, fixed_abs, tag = 'smem constant byte address 0x4 - core index']
  #allocation1 [shape = 'u32[144,128]{1,0:T(1,128)}', space=vmem, size = 0x12000, scoped, tag = 'internal scratch']
  %s0 = inlined_call_operand.vmem [shape: f32[8,32], index: 0, kind: input, shape index: {}]
  %s1 = inlined_call_operand.vmem [shape: s32[8,1], index: 1, kind: input, shape index: {}]
  %s2 = inlined_call_operand.hbm [shape: f32[8,128], index: 2, kind: output, shape index: {}]
  %s3 = sld [smem:[#allocation0]]
  $region18: #{tpu_custom_call.1} parent=0
    _
  %s5 = ssub.s32 1, %s3
  %s6 = scalar_select 0, %s5, %s3
  $region1: #{tpu_custom_call.1} parent=0
    #allocation2 [shape = 'u8[4096]{0}', space=vmem, size = 0x1000, scoped, tag = 'output window, operand 0, single buffered']
    #allocation3 [shape = 's32[1]{0}', space=sflag, size = 0x4, scoped, tag = 'scoped memory for tpu_custom_call.1']
    %7 = vsyncpa [#allocation3], 0
    // Predicated region
    $region2: #{tpu_custom_call.1} parent=1 // pred_check
      _
    $region3: #{tpu_custom_call.1} parent=1 // pred_check_branch
      %9 = sbr.rel (0) target = $region5
    $region4: #{tpu_custom_call.1} parent=1 // pred_region
      _
    $region5: #{tpu_custom_call.1} parent=1 // pred_fallthru
      _
    // Predicated region
    $region6: #{tpu_custom_call.1} parent=1 // pred_check
      _
    $region7: #{tpu_custom_call.1} parent=1 // pred_check_branch
      %11 = sbr.rel (0) target = $region9
    $region8: #{tpu_custom_call.1} parent=1 // pred_region
      _
    $region9: #{tpu_custom_call.1} parent=1 // pred_fallthru
      _
    %v12 = vld [vmem:[%s0] sm:$0xff]
    %v13 = vld [vmem:[%s1] sm:$0xff]
    %vm14 = vcmask 261120
    %v15 = vsel %vm14, %v12, -inf
    %16 = vmax.xlane.f32.xlu0 %v15
    %v17 = vpop.xlane.xlu0 %16
    %v18 = vlaneseq
    %v19 = vand.u32 %v18, 127
    %20 = vset.pattern.permute.xlu0 0
    %21 = vperm.xlu0 %20, %v13
    %v22 = vpop.permute.xlu0 %21
    %vm23 = vcmp.eq.s32.totalorder %v19, %v22
    %v24 = vsel %vm23, %v12, 0.0
    %v25 = vsel %vm14, %v24, 0.0
    %26 = vadd.xlane.f32.xlu0 %v25
    %v27 = vpop.xlane.xlu0 %26
    %v28 = vsub.f32 %v12, %v17
    %v29 = vmul.f32 %v28, 1.442695
    %v30 = vpow.pop %v29
    %v31 = vsel %vm14, %v30, 0.0
    %32 = vadd.xlane.f32.xlu0 %v31
    %v33 = vpop.xlane.xlu0 %32
    %v34 = vlog2.pop %v33
    %v35 = vmul.f32 %v34, 0.6931472
    %v36 = vsub.f32 %v27, %v17
    %v37 = vsub.f32 %v35, %v36
    %v38 = vsub.f32 0.0, %v37
    %v39 = vmul.f32 %v38, 1.442695
    %v40 = vpow.pop %v39
    %v41 = vsub.f32 1.0, %v40
    %v42 = vmax.f32 %v41, 0.0
    %v43 = vmul.f32 %v42, %v42
    %v44 = vrsqrt.pop %v42
    %v45 = vmul.f32 %v42, %v44
    %vm46 = vcmp.eq.f32.partialorder %v42, inf
    %v47 = vsel %vm46, %v42, %v45
    %vm48 = vcmp.eq.f32.partialorder %v42, 0.0
    %v49 = vand.u32 %v42, 2147483648
    %v50 = vsel %vm48, %v49, %v47
    %v51 = vmul.f32 %v43, %v50
    %v52 = vlaneseq
    %v53 = vshrl.u32 %v52, 7
    %s54 = smul.u32 0, 8
    %v55 = vstv %s54
    %v56 = vadd.s32 %v53, %v55
    %vm57 = vcmp.lt.s32.totalorder %v56, 8
    %v58 = vmul.f32 %v51, %v37
    %v59 = vsel %vm57, %v58, 0.0
    %vm60 = vcmask 7168
    %v61 = vsel %vm60, %v59, 0.0
    %62 = vadd.xlane.f32.xlu0 %v61
    %v63 = vpop.xlane.xlu0 %62
    %v64 = vrot.slane %v63, 4
    %v65 = vadd.f32 %v63, %v64
    %v66 = vrot.slane %v65, 2
    %v67 = vadd.f32 %v65, %v66
    %v68 = vrot.slane %v67, 1
    %v69 = vadd.f32 %v67, %v68
    %s70 = vtos %v69
    %v71 = vstv %s70
    %72 = vst [vmem:[#allocation2] sm:$0xff] %v71
    // Predicated region
    $region10: #{tpu_custom_call.1} parent=1 // pred_check
      _
    $region11: #{tpu_custom_call.1} parent=1 // pred_check_branch
      %74 = sbr.rel (0) target = $region13
    $region12: #{tpu_custom_call.1} parent=1 // pred_region
      %s76 = ssub.s32 128, 128
      %77 = vsyncadd [#allocation3], %s76
      %s79 = sshll.u32 [#allocation2], 4
      %s80 = int_to_ptr.vmem [resolvable:$true] %s79
      %82 = dma.vmem_to_hbm [thread:$0]  %s80, 128, %s2, [#allocation3]
    $region13: #{tpu_custom_call.1} parent=1 // pred_fallthru
      _
    // Predicated region
    $region14: #{tpu_custom_call.1} parent=1 // pred_check
      _
    $region15: #{tpu_custom_call.1} parent=1 // pred_check_branch
      %84 = sbr.rel (0) target = $region17
    $region16: #{tpu_custom_call.1} parent=1 // pred_region
      %85 = dma.done [#allocation3], 128
    $region17: #{tpu_custom_call.1} parent=1 // pred_fallthru
      _
    %86 = vsyncpa [#allocation3], 1

</llo_original>
